<compile_context>
chip_gen: v7x
topology: tpu7x:2x2x1
jax: 0.10.0
libtpu: 0.0.40
codegen_flags: <defaults>
</compile_context>

<pallas_src>
import functools

import jax
import jax.numpy as jnp
from jax.experimental import pallas as pl
from jax.experimental.pallas import tpu as pltpu


def _round_up(a, m):
    return (a + m - 1) // m * m


def _sublane(dtype):
    # rows per (sublane, 128) VMEM tile for this dtype
    return {4: 8, 2: 16, 1: 32}.get(jnp.dtype(dtype).itemsize, 8)


def _crop_rows_kernel(x_hbm, o_ref, buf, sem, *, cb, row_lo, rows, r0, y1, h, w):
    """General path: DMA a sublane-aligned band of `rows` full-W rows into VMEM
    scratch, then crop the row remainder and W with a static VMEM slice."""
    i = pl.program_id(0)
    c0 = pl.multiple_of(i * cb, cb)
    cp = pltpu.make_async_copy(
        x_hbm.at[pl.ds(c0, cb), pl.ds(row_lo, rows), :],
        buf,
        sem,
    )
    cp.start()
    cp.wait()
    o_ref[...] = buf[:, r0:r0 + h, y1:y1 + w]


def _crop_window_kernel(x_hbm, o_ref, sem, *, cb, x1, y1, h, w):
    """Tile-aligned fast path: DMA the exact (h, w) window straight into the
    auto-pipelined output block (no intermediate VMEM copy at all)."""
    i = pl.program_id(0)
    c0 = pl.multiple_of(i * cb, cb)
    cp = pltpu.make_async_copy(
        x_hbm.at[pl.ds(c0, cb), pl.ds(x1, h), pl.ds(y1, w)],
        o_ref,
        sem,
    )
    cp.start()
    cp.wait()


def center_crop(x, h, w):
    """Center-crop x (N, C, H, W) to (N, C, h, w) with the reference module's
    rounding: x1 = int(round((H - h) / 2.0)), y1 = int(round((W - w) / 2.0))."""
    N, C, H, W = x.shape
    if h > H or w > W:
        raise ValueError(
            f"CenterCrop: crop ({h}, {w}) larger than input ({H}, {W}) is not "
            "supported (the reference module's slice is ill-defined there).")

    x1 = int(round((H - h) / 2.0))
    y1 = int(round((W - w) / 2.0))

    NC = N * C
    xr = x.reshape(NC, H, W)            # free for contiguous NCHW
    dtype = x.dtype
    itemsize = jnp.dtype(dtype).itemsize
    sub = _sublane(dtype)

    # --- choose the DMA window ----------------------------------------------
    aligned_rows = (x1 % sub == 0) and (h % sub == 0 or x1 + h == H)
    aligned_cols = (y1 % 128 == 0) and (w % 128 == 0 or y1 + w == W)
    window_dma = aligned_rows and aligned_cols and (w == W or w * itemsize >= 512)

    if window_dma:
        row_lo, rows, r0 = x1, h, 0                      # unused by this path
        in_buf_bytes_per_c = 0                           # DMA lands in o_ref
        bytes_read_per_c = h * w * itemsize
    else:
        # Sublane-aligned band of full-W rows covering [x1, x1 + h).
        row_lo = (x1 // sub) * sub
        row_hi = min(H, _round_up(x1 + h, sub))
        rows = row_hi - row_lo
        r0 = x1 - row_lo
        in_buf_bytes_per_c = _round_up(rows, sub) * _round_up(W, 128) * itemsize
        bytes_read_per_c = rows * W * itemsize

    # --- VMEM budget with padded-layout math, per generation -----------------
    out_blk_bytes_per_c = _round_up(h, sub) * _round_up(w, 128) * itemsize
    per_c = 2 * out_blk_bytes_per_c + in_buf_bytes_per_c  # 2x: output is double-buffered

    try:
        vmem_cap = int(pltpu.get_tpu_info().vmem_capacity_bytes)
    except Exception:
        vmem_cap = 64 * 1024 * 1024     # conservative: v7x per-core VMEM
    budget = min(28 * 1024 * 1024, vmem_cap // 2)

    max_cb = max(1, budget // per_c)
    cb = max(d for d in range(1, min(NC, max_cb) + 1) if NC % d == 0)

    used = cb * per_c
    vmem_limit = int(min(vmem_cap, max(used + (8 << 20), 32 << 20)))

    if window_dma:
        kernel = functools.partial(_crop_window_kernel, cb=cb, x1=x1, y1=y1, h=h, w=w)
        scratch = [pltpu.SemaphoreType.DMA(())]
    else:
        kernel = functools.partial(_crop_rows_kernel, cb=cb, row_lo=row_lo,
                                   rows=rows, r0=r0, y1=y1, h=h, w=w)
        scratch = [pltpu.VMEM((cb, rows, W), dtype), pltpu.SemaphoreType.DMA(())]

    bytes_read = NC * bytes_read_per_c
    bytes_written = NC * h * w * itemsize

    out = pl.pallas_call(
        kernel,
        out_shape=jax.ShapeDtypeStruct((NC, h, w), dtype),
        grid=(NC // cb,),
        in_specs=[pl.BlockSpec(memory_space=pl.ANY)],   # raw HBM ref, manual DMA
        # Output block's last two dims equal the full output dims (h, w), so
        # the (8, 128) constraint is satisfied for any h, w.
        out_specs=pl.BlockSpec((cb, h, w), lambda i: (i, 0, 0)),
        scratch_shapes=scratch,
        compiler_params=pltpu.CompilerParams(
            dimension_semantics=("parallel",),
            vmem_limit_bytes=vmem_limit,
        ),
        cost_estimate=pl.CostEstimate(
            flops=0, transcendentals=0,
            bytes_accessed=bytes_read + bytes_written),
    )(xr)
    return out.reshape(N, C, h, w)


if __name__ == "__main__":
    key = jax.random.PRNGKey(0)
    N, C, H, W = 2, 4, 16, 16
    crop_h, crop_w = 8, 8

    x = jax.random.normal(key, (N, C, H, W), dtype=jnp.float32)

    out = jax.block_until_ready(center_crop(x, crop_h, crop_w))

    # Reference check against plain JAX slicing (same semantics as the
    # PyTorch module).
    x1 = int(round((H - crop_h) / 2.0))
    y1 = int(round((W - crop_w) / 2.0))
    ref = x[:, :, x1:x1 + crop_h, y1:y1 + crop_w]
    assert out.shape == (N, C, crop_h, crop_w)
    assert jnp.array_equal(out, ref)

    print("KERNEL_OK")
</pallas_src>

<mosaic_0001>
module attributes {stable_mosaic.version = 11 : i64} {
  func.func @_crop_rows_kernel(%arg0: i32, %arg1: memref<8x16x16xf32, #tpu.memory_space<any>>, %arg2: memref<8x8x8xf32, #tpu.memory_space<vmem>>, %arg3: memref<8x16x16xf32, #tpu.memory_space<vmem>>, %arg4: memref<!tpu.dma_semaphore, #tpu.memory_space<semaphore_mem>>) attributes {dimension_semantics = [#tpu.dimension_semantics<parallel>], iteration_bounds = array<i64: 1>, scalar_prefetch = 0 : i64, scratch_operands = 2 : i64, tpu.core_type = #tpu.core_type<tc>, window_params = [{}, {transform_indices = @transform_1, window_bounds = array<i64: 8, 8, 8>}]} {
    %c8_i32 = arith.constant 8 : i32
    %0 = arith.muli %arg0, %c8_i32 : i32
    %1 = tpu.assume_multiple %0, 8 : i32
    %c0_i32 = arith.constant 0 : i32
    %c0_i32_0 = arith.constant 0 : i32
    %2 = tpu.memref_slice %arg1[%1, %c0_i32, %c0_i32_0] : memref<8x16x16xf32, #tpu.memory_space<any>> -> memref<8x16x16xf32, #tpu.memory_space<any>>
    tpu.enqueue_dma source(%2 : memref<8x16x16xf32, #tpu.memory_space<any>>) target(%arg3 : memref<8x16x16xf32, #tpu.memory_space<vmem>>) target_semaphore(%arg4 : memref<!tpu.dma_semaphore, #tpu.memory_space<semaphore_mem>>)
    %c0_i32_1 = arith.constant 0 : i32
    %c0_i32_2 = arith.constant 0 : i32
    %3 = tpu.memref_slice %arg1[%1, %c0_i32_1, %c0_i32_2] : memref<8x16x16xf32, #tpu.memory_space<any>> -> memref<8x16x16xf32, #tpu.memory_space<any>>
    tpu.wait_dma2 semaphore(%arg4 : memref<!tpu.dma_semaphore, #tpu.memory_space<semaphore_mem>>) src(%3 : memref<8x16x16xf32, #tpu.memory_space<any>>) dst(%arg3 : memref<8x16x16xf32, #tpu.memory_space<vmem>>)
    %c0 = arith.constant 0 : index
    %c4 = arith.constant 4 : index
    %c4_3 = arith.constant 4 : index
    %4 = vector.load %arg3[%c0, %c4, %c4_3] : memref<8x16x16xf32, #tpu.memory_space<vmem>>, vector<8x8x8xf32>
    %c0_4 = arith.constant 0 : index
    %c0_5 = arith.constant 0 : index
    %c0_6 = arith.constant 0 : index
    %5 = vector.load %arg2[%c0_4, %c0_5, %c0_6] : memref<8x8x8xf32, #tpu.memory_space<vmem>>, vector<8x8x8xf32>
    tpu.vector_store %arg2[%c0_4, %c0_5, %c0_6], %4 {strides = array<i32>} : memref<8x8x8xf32, #tpu.memory_space<vmem>>, vector<8x8x8xf32>,
    return
  }
  func.func @transform_1(%arg0: i32) -> (i32, i32, i32) {
    %c0_i32 = arith.constant 0 : i32
    %c0_i32_0 = arith.constant 0 : i32
    %c0_i32_1 = arith.constant 0 : i32
    return %arg0, %c0_i32, %c0_i32_0 : i32, i32, i32
  }
}

</mosaic_0001>

<llo_original>
// kernel: tpu_custom_call.1
$region0: #{tpu_custom_call.1}
  #allocation0 [shape = 'u32[]', space=smem, size = 0x4, offset = 0x4, fixed_abs, tag = 'smem constant byte address 0x4 - core index']
  #allocation1 [shape = 'u32[144,128]{1,0:T(1,128)}', space=vmem, size = 0x12000, scoped, tag = 'internal scratch']
  #allocation2 [shape = 'f32[8,16,16]{2,1,0:T(8,128)}', space=vmem, size = 0x10000, scoped, tag = 'scratch operand']
  #allocation3 [shape = 's32[1]{0}', space=sflag, size = 0x4, scoped, tag = 'scratch operand']
  #allocation6 [shape = 's32[]', space=sflag, size = 0x4, offset = 0, fixed_abs, tag = 'sflag constant byte address 0x0 - dummy sync flag']
  #allocation7 [shape = 's32[]', space=sflag, size = 0x4, offset = 0, fixed_abs, tag = 'sflag constant byte address 0x0 - dummy sync flag']
  #allocation8 [shape = 'u32[]', space=smem, size = 0x4, offset = 0x44, fixed_abs, tag = 'smem constant byte address 0x44 - assertion arg 0']
  #allocation9 [shape = 'u32[]', space=smem, size = 0x4, offset = 0x48, fixed_abs, tag = 'smem constant byte address 0x48 - assertion arg 1']
  %s0 = inlined_call_operand.hbm [shape: f32[8,16,16], index: 0, kind: input, shape index: {}]
  %s1 = inlined_call_operand.hbm [shape: f32[8,8,8], index: 1, kind: output, shape index: {}]
  %s2 = sld [smem:[#allocation0]]
  $region14: #{tpu_custom_call.1} parent=0
    _
  %s4 = ssub.s32 1, %s2
  %s5 = scalar_select 0, %s4, %s2
  $region1: #{tpu_custom_call.1} parent=0
    #allocation4 [shape = 'u8[32768]{0}', space=vmem, size = 0x8000, scoped, tag = 'output window, operand 0, single buffered']
    #allocation5 [shape = 's32[1]{0}', space=sflag, size = 0x4, scoped, tag = 'scoped memory for tpu_custom_call.1']
    %6 = vsyncpa [#allocation5], 0
    %s7 = smul.u32 0, 8
    %s8 = smul.u32 %s7, 16
    %s9 = smul.addr %s8, 16
    %s10 = scalar_lea.hbm %s0, %s9
    // Predicated region
    $region2: #{tpu_custom_call.1} parent=1 // pred_check
      _
    $region3: #{tpu_custom_call.1} parent=1 // pred_check_branch
      %12 = sbr.rel target = $region5
    $region4: #{tpu_custom_call.1} parent=1 // pred_region
      %13 = sst [smem:[#allocation8]] [#allocation7]
      %14 = sst [smem:[#allocation9]] [#allocation6]
    $region5: #{tpu_custom_call.1} parent=1 // pred_fallthru
      _
    %16 = shalt.err (0)
    %s18 = sshll.u32 [#allocation2], 4
    %s19 = int_to_ptr.vmem [resolvable:$true] %s18
    %21 = dma.hbm_to_vmem [thread:$0]  %s10, 2048, %s19, [#allocation3]
    %s22 = smul.u32 8, 16
    %s23 = smul.u32 %s22, 1
    %s24 = sshll.u32 %s23, 4
    %25 = dma.done [#allocation3], %s24
    %v26 = vld [vmem:[#allocation2 + $0x4] sm:$0xff]
    %v27 = vld [vmem:[#allocation2 + $0x14] sm:$0xff]
    %v28 = vld [vmem:[#allocation2 + $0x24] sm:$0xff]
    %v29 = vld [vmem:[#allocation2 + $0x34] sm:$0xff]
    %v30 = vld [vmem:[#allocation2 + $0x44] sm:$0xff]
    %v31 = vld [vmem:[#allocation2 + $0x54] sm:$0xff]
    %v32 = vld [vmem:[#allocation2 + $0x64] sm:$0xff]
    %v33 = vld [vmem:[#allocation2 + $0x74] sm:$0xff]
    %42 = vrot.lane.b32.xlu0 %v26, 124
    %v43 = vpop.permute.xlu0 %42
    %44 = vrot.lane.b32.xlu0 %v27, 124
    %v45 = vpop.permute.xlu0 %44
    %46 = vrot.lane.b32.xlu0 %v28, 124
    %v47 = vpop.permute.xlu0 %46
    %48 = vrot.lane.b32.xlu0 %v29, 124
    %v49 = vpop.permute.xlu0 %48
    %50 = vrot.lane.b32.xlu0 %v30, 124
    %v51 = vpop.permute.xlu0 %50
    %52 = vrot.lane.b32.xlu0 %v31, 124
    %v53 = vpop.permute.xlu0 %52
    %54 = vrot.lane.b32.xlu0 %v32, 124
    %v55 = vpop.permute.xlu0 %54
    %56 = vrot.lane.b32.xlu0 %v33, 124
    %v57 = vpop.permute.xlu0 %56
    %vm66 = vcmask 64512
    %67 = vst.msk [vmem:[#allocation4] sm:$0xff] %vm66, %v43
    %68 = vst.msk [vmem:[#allocation4 + $0x8] sm:$0xff] %vm66, %v45
    %69 = vst.msk [vmem:[#allocation4 + $0x10] sm:$0xff] %vm66, %v47
    %70 = vst.msk [vmem:[#allocation4 + $0x18] sm:$0xff] %vm66, %v49
    %71 = vst.msk [vmem:[#allocation4 + $0x20] sm:$0xff] %vm66, %v51
    %72 = vst.msk [vmem:[#allocation4 + $0x28] sm:$0xff] %vm66, %v53
    %73 = vst.msk [vmem:[#allocation4 + $0x30] sm:$0xff] %vm66, %v55
    %74 = vst.msk [vmem:[#allocation4 + $0x38] sm:$0xff] %vm66, %v57
    // Predicated region
    $region6: #{tpu_custom_call.1} parent=1 // pred_check
      _
    $region7: #{tpu_custom_call.1} parent=1 // pred_check_branch
      %76 = sbr.rel (0) target = $region9
    $region8: #{tpu_custom_call.1} parent=1 // pred_region
      %s78 = ssub.s32 1024, 1024
      %79 = vsyncadd [#allocation5], %s78
      %s80 = sshll.u32 [#allocation4], 4
      %s81 = int_to_ptr.vmem [resolvable:$true] %s80
      %86 = dma.vmem_to_hbm [thread:$0]  %s81, 1024, %s1, [#allocation5], 128, 128, 8
    $region9: #{tpu_custom_call.1} parent=1 // pred_fallthru
      _
    // Predicated region
    $region10: #{tpu_custom_call.1} parent=1 // pred_check
      _
    $region11: #{tpu_custom_call.1} parent=1 // pred_check_branch
      %88 = sbr.rel (0) target = $region13
    $region12: #{tpu_custom_call.1} parent=1 // pred_region
      %89 = dma.done [#allocation5], 1024
    $region13: #{tpu_custom_call.1} parent=1 // pred_fallthru
      _
    %90 = vsyncpa [#allocation5], 1
  %91 = vsyncmov [#allocation3]
  %s92 = vpop.sfrf %91
  %p93 = scmp.eq.s32.totalorder %s92, 0
  %p94 = pneg %p93
  %96 = shalt.err (%p94)

</llo_original>
